<compile_context>
chip_gen: v7x
topology: tpu7x:2x2x1
jax: 0.10.0
libtpu: 0.0.40
codegen_flags: <defaults>
</compile_context>

<pallas_src>
import jax
import jax.numpy as jnp
from jax.experimental import pallas as pl
from jax.experimental.pallas import tpu as pltpu

# ---- small, TPU-friendly stand-in dimensions -------------------------------
N = 2          # batch
C = 4          # input channels
H = W = 16     # spatial
S = H * W      # flattened spatial (lane axis: 256 = 2 * 128)
F = 128        # backbone feature dim   (stands in for resnet50's 2048)
HID = 128      # projection hidden dim  (stands in for 512)
PROJ = 128     # projection_dim (module default of 128)


def simclr_kernel(x_ref, wct_ref, w1_ref, b1_ref, w2_ref, b2_ref, out_ref):
    """Fused backbone stand-in (1x1 conv + ReLU + GAP) + projection head."""
    x = x_ref[...]                       # (NB, C, S)  — S lane-dense
    wct = wct_ref[...]                   # (F, C)      — conv weight, transposed

    # --- backbone stand-in: 1x1 conv as C-term VPU broadcast-FMA ------------
    # h[n, f, s] = sum_c wct[f, c] * x[n, c, s].  K = C = 4 is far too small
    # for the MXU; a static unroll keeps everything on the VPU with no
    # cross-lane traffic (wct column broadcasts over lanes, x row over
    # sublanes).
    h = wct[None, :, 0:1] * x[:, 0:1, :]                     # (NB, F, S)
    for c in range(1, C):                # static unroll, C = 4
        h = h + wct[None, :, c:c + 1] * x[:, c:c + 1, :]
    h = jnp.maximum(h, 0.0)              # ReLU on the VPU (f32)

    # --- global average pool: lane sum over S, then a single 1/S scale ------
    feats = jnp.sum(h, axis=-1) * jnp.float32(1.0 / S)       # (NB, F)

    # --- projection head: Linear(F, HID) -> ReLU -> Linear(HID, PROJ) -------
    z = jnp.dot(feats, w1_ref[...],
                preferred_element_type=jnp.float32) + b1_ref[...]   # (NB, HID)
    z = jnp.maximum(z, 0.0)
    p = jnp.dot(z, w2_ref[...],
                preferred_element_type=jnp.float32) + b2_ref[...]   # (NB, PROJ)

    out_ref[...] = p.astype(out_ref.dtype)                   # lane-dense store


def simclr_forward(x_nchw, params):
    """x_nchw: (N, C, H, W) float32. Returns projections (N, PROJ)."""
    n, c, h, w = x_nchw.shape
    s = h * w
    # NCHW -> (N, C, S): pure reshape (minor dims merge), no transpose.
    x_ncs = x_nchw.reshape(n, c, s)

    wct, w1, b1, w2, b2 = params

    # Batch block.  Here NB == N (grid of 1); at real scale pick NB ~ 128 so
    # Pallas double-buffers the activation DMA and megacore splits the batch.
    nb = n
    grid = (pl.cdiv(n, nb),)

    return pl.pallas_call(
        simclr_kernel,
        out_shape=jax.ShapeDtypeStruct((n, PROJ), jnp.float32),
        grid_spec=pltpu.PrefetchScalarGridSpec(
            num_scalar_prefetch=0,
            grid=grid,
            in_specs=[
                pl.BlockSpec((nb, c, s), lambda i: (i, 0, 0)),     # activations
                pl.BlockSpec((F, C), lambda i: (0, 0)),            # conv weight (resident)
                pl.BlockSpec((F, HID), lambda i: (0, 0)),          # w1 (resident)
                pl.BlockSpec((1, HID), lambda i: (0, 0)),          # b1
                pl.BlockSpec((HID, PROJ), lambda i: (0, 0)),       # w2 (resident)
                pl.BlockSpec((1, PROJ), lambda i: (0, 0)),         # b2
            ],
            out_specs=pl.BlockSpec((nb, PROJ), lambda i: (i, 0)),  # lane-dense out
        ),
        compiler_params=pltpu.CompilerParams(
            dimension_semantics=("parallel",)),
    )(x_ncs, wct, w1, b1, w2, b2)


def init_params(key):
    """Deterministic synthetic parameters.

    Conv weight is stored transposed as (F, C) so the kernel can extract
    sublane columns without an XLU transpose; linear weights are (in, out).
    """
    k0, k1, k2, k3, k4 = jax.random.split(key, 5)
    wct = jax.random.normal(k0, (F, C), jnp.float32) * 0.1       # 1x1 conv (F, C)
    w1 = jax.random.normal(k1, (F, HID), jnp.float32) * 0.1      # Linear 1
    b1 = jax.random.normal(k2, (1, HID), jnp.float32) * 0.01
    w2 = jax.random.normal(k3, (HID, PROJ), jnp.float32) * 0.1   # Linear 2
    b2 = jax.random.normal(k4, (1, PROJ), jnp.float32) * 0.01
    return wct, w1, b1, w2, b2


if __name__ == "__main__":
    key = jax.random.PRNGKey(0)
    kx, kp = jax.random.split(key)
    x = jax.random.normal(kx, (N, C, H, W), jnp.float32)
    params = init_params(kp)

    out = simclr_forward(x, params)
    out = jax.block_until_ready(out)
    assert out.shape == (N, PROJ) and out.dtype == jnp.float32

    # pure-JAX reference check (same math, no Pallas)
    wct, w1, b1, w2, b2 = params
    x_ncs = x.reshape(N, C, S)
    h_ref = jnp.einsum("fc,ncs->nfs", wct, x_ncs)
    feats = jnp.mean(jnp.maximum(h_ref, 0.0), axis=-1)
    ref = jnp.maximum(feats @ w1 + b1, 0.0) @ w2 + b2
    assert jnp.allclose(out, ref, atol=1e-4, rtol=1e-4)

    print("KERNEL_OK")
</pallas_src>

<mosaic_0001>
module attributes {stable_mosaic.version = 11 : i64} {
  func.func @simclr_kernel(%arg0: i32, %arg1: memref<2x4x256xf32, #tpu.memory_space<vmem>>, %arg2: memref<128x4xf32, #tpu.memory_space<vmem>>, %arg3: memref<128x128xf32, #tpu.memory_space<vmem>>, %arg4: memref<1x128xf32, #tpu.memory_space<vmem>>, %arg5: memref<128x128xf32, #tpu.memory_space<vmem>>, %arg6: memref<1x128xf32, #tpu.memory_space<vmem>>, %arg7: memref<2x128xf32, #tpu.memory_space<vmem>>) attributes {dimension_semantics = [#tpu.dimension_semantics<parallel>], iteration_bounds = array<i64: 1>, scalar_prefetch = 0 : i64, scratch_operands = 0 : i64, tpu.core_type = #tpu.core_type<tc>, window_params = [{transform_indices = @transform_0, window_bounds = array<i64: 2, 4, 256>}, {pipeline_mode = #tpu.pipeline_mode<synchronous>, transform_indices = @transform_1, window_bounds = array<i64: 128, 4>}, {pipeline_mode = #tpu.pipeline_mode<synchronous>, transform_indices = @transform_2, window_bounds = array<i64: 128, 128>}, {pipeline_mode = #tpu.pipeline_mode<synchronous>, transform_indices = @transform_3, window_bounds = array<i64: 1, 128>}, {pipeline_mode = #tpu.pipeline_mode<synchronous>, transform_indices = @transform_4, window_bounds = array<i64: 128, 128>}, {pipeline_mode = #tpu.pipeline_mode<synchronous>, transform_indices = @transform_5, window_bounds = array<i64: 1, 128>}, {transform_indices = @transform_6, window_bounds = array<i64: 2, 128>}]} {
    %c0 = arith.constant 0 : index
    %c0_0 = arith.constant 0 : index
    %c0_1 = arith.constant 0 : index
    %0 = vector.load %arg1[%c0, %c0_0, %c0_1] : memref<2x4x256xf32, #tpu.memory_space<vmem>>, vector<2x4x256xf32>
    %c0_2 = arith.constant 0 : index
    %c0_3 = arith.constant 0 : index
    %1 = vector.load %arg2[%c0_2, %c0_3] : memref<128x4xf32, #tpu.memory_space<vmem>>, vector<128x4xf32>
    %2 = vector.extract_strided_slice %1 {offsets = [0, 0], sizes = [128, 1], strides = [1, 1]} : vector<128x4xf32> to vector<128x1xf32>
    %3 = vector.shape_cast %2 : vector<128x1xf32> to vector<1x128x1xf32>
    %4 = vector.extract_strided_slice %0 {offsets = [0, 0, 0], sizes = [2, 1, 256], strides = [1, 1, 1]} : vector<2x4x256xf32> to vector<2x1x256xf32>
    %5 = vector.broadcast %3 : vector<1x128x1xf32> to vector<2x128x256xf32>
    %6 = vector.broadcast %4 : vector<2x1x256xf32> to vector<2x128x256xf32>
    %7 = arith.mulf %5, %6 : vector<2x128x256xf32>
    %8 = vector.extract_strided_slice %1 {offsets = [0, 1], sizes = [128, 1], strides = [1, 1]} : vector<128x4xf32> to vector<128x1xf32>
    %9 = vector.shape_cast %8 : vector<128x1xf32> to vector<1x128x1xf32>
    %10 = vector.extract_strided_slice %0 {offsets = [0, 1, 0], sizes = [2, 1, 256], strides = [1, 1, 1]} : vector<2x4x256xf32> to vector<2x1x256xf32>
    %11 = vector.broadcast %9 : vector<1x128x1xf32> to vector<2x128x256xf32>
    %12 = vector.broadcast %10 : vector<2x1x256xf32> to vector<2x128x256xf32>
    %13 = arith.mulf %11, %12 : vector<2x128x256xf32>
    %14 = arith.addf %7, %13 : vector<2x128x256xf32>
    %15 = vector.extract_strided_slice %1 {offsets = [0, 2], sizes = [128, 1], strides = [1, 1]} : vector<128x4xf32> to vector<128x1xf32>
    %16 = vector.shape_cast %15 : vector<128x1xf32> to vector<1x128x1xf32>
    %17 = vector.extract_strided_slice %0 {offsets = [0, 2, 0], sizes = [2, 1, 256], strides = [1, 1, 1]} : vector<2x4x256xf32> to vector<2x1x256xf32>
    %18 = vector.broadcast %16 : vector<1x128x1xf32> to vector<2x128x256xf32>
    %19 = vector.broadcast %17 : vector<2x1x256xf32> to vector<2x128x256xf32>
    %20 = arith.mulf %18, %19 : vector<2x128x256xf32>
    %21 = arith.addf %14, %20 : vector<2x128x256xf32>
    %22 = vector.extract_strided_slice %1 {offsets = [0, 3], sizes = [128, 1], strides = [1, 1]} : vector<128x4xf32> to vector<128x1xf32>
    %23 = vector.shape_cast %22 : vector<128x1xf32> to vector<1x128x1xf32>
    %24 = vector.extract_strided_slice %0 {offsets = [0, 3, 0], sizes = [2, 1, 256], strides = [1, 1, 1]} : vector<2x4x256xf32> to vector<2x1x256xf32>
    %25 = vector.broadcast %23 : vector<1x128x1xf32> to vector<2x128x256xf32>
    %26 = vector.broadcast %24 : vector<2x1x256xf32> to vector<2x128x256xf32>
    %27 = arith.mulf %25, %26 : vector<2x128x256xf32>
    %28 = arith.addf %21, %27 : vector<2x128x256xf32>
    %cst = arith.constant 0.000000e+00 : f32
    %29 = vector.broadcast %cst : f32 to vector<2x128x256xf32>
    %30 = arith.maximumf %28, %29 : vector<2x128x256xf32>
    %cst_4 = arith.constant dense<0.000000e+00> : vector<2x128xf32>
    %31 = vector.multi_reduction <add>, %30, %cst_4 [2] : vector<2x128x256xf32> to vector<2x128xf32>
    %cst_5 = arith.constant 3.906250e-03 : f32
    %32 = vector.broadcast %cst_5 : f32 to vector<2x128xf32>
    %33 = arith.mulf %31, %32 : vector<2x128xf32>
    %c0_6 = arith.constant 0 : index
    %c0_7 = arith.constant 0 : index
    %34 = vector.load %arg3[%c0_6, %c0_7] : memref<128x128xf32, #tpu.memory_space<vmem>>, vector<128x128xf32>
    %cst_8 = arith.constant dense<0.000000e+00> : vector<2x128xf32>
    %35 = tpu.matmul %33, %34, %cst_8 {dimension_numbers = #tpu.dot_dimension_numbers<[1], [0], [0], [1], [0, 0, 1, 1], [], []>} : vector<2x128xf32>, vector<128x128xf32>, vector<2x128xf32> -> vector<2x128xf32>
    %c0_9 = arith.constant 0 : index
    %c0_10 = arith.constant 0 : index
    %36 = vector.load %arg4[%c0_9, %c0_10] : memref<1x128xf32, #tpu.memory_space<vmem>>, vector<1x128xf32>
    %37 = vector.broadcast %36 : vector<1x128xf32> to vector<2x128xf32>
    %38 = arith.addf %35, %37 : vector<2x128xf32>
    %cst_11 = arith.constant 0.000000e+00 : f32
    %39 = vector.broadcast %cst_11 : f32 to vector<2x128xf32>
    %40 = arith.maximumf %38, %39 : vector<2x128xf32>
    %c0_12 = arith.constant 0 : index
    %c0_13 = arith.constant 0 : index
    %41 = vector.load %arg5[%c0_12, %c0_13] : memref<128x128xf32, #tpu.memory_space<vmem>>, vector<128x128xf32>
    %cst_14 = arith.constant dense<0.000000e+00> : vector<2x128xf32>
    %42 = tpu.matmul %40, %41, %cst_14 {dimension_numbers = #tpu.dot_dimension_numbers<[1], [0], [0], [1], [0, 0, 1, 1], [], []>} : vector<2x128xf32>, vector<128x128xf32>, vector<2x128xf32> -> vector<2x128xf32>
    %c0_15 = arith.constant 0 : index
    %c0_16 = arith.constant 0 : index
    %43 = vector.load %arg6[%c0_15, %c0_16] : memref<1x128xf32, #tpu.memory_space<vmem>>, vector<1x128xf32>
    %44 = vector.broadcast %43 : vector<1x128xf32> to vector<2x128xf32>
    %45 = arith.addf %42, %44 : vector<2x128xf32>
    %c0_17 = arith.constant 0 : index
    %c0_18 = arith.constant 0 : index
    %46 = vector.load %arg7[%c0_17, %c0_18] : memref<2x128xf32, #tpu.memory_space<vmem>>, vector<2x128xf32>
    tpu.vector_store %arg7[%c0_17, %c0_18], %45 {strides = array<i32>} : memref<2x128xf32, #tpu.memory_space<vmem>>, vector<2x128xf32>,
    return
  }
  func.func @transform_0(%arg0: i32) -> (i32, i32, i32) {
    %c0_i32 = arith.constant 0 : i32
    %c0_i32_0 = arith.constant 0 : i32
    %c0_i32_1 = arith.constant 0 : i32
    return %arg0, %c0_i32, %c0_i32_0 : i32, i32, i32
  }
  func.func @transform_1(%arg0: i32) -> (i32, i32) {
    %c0_i32 = arith.constant 0 : i32
    %c0_i32_0 = arith.constant 0 : i32
    %c0_i32_1 = arith.constant 0 : i32
    return %c0_i32, %c0_i32_0 : i32, i32
  }
  func.func @transform_2(%arg0: i32) -> (i32, i32) {
    %c0_i32 = arith.constant 0 : i32
    %c0_i32_0 = arith.constant 0 : i32
    %c0_i32_1 = arith.constant 0 : i32
    return %c0_i32, %c0_i32_0 : i32, i32
  }
  func.func @transform_3(%arg0: i32) -> (i32, i32) {
    %c0_i32 = arith.constant 0 : i32
    %c0_i32_0 = arith.constant 0 : i32
    %c0_i32_1 = arith.constant 0 : i32
    return %c0_i32, %c0_i32_0 : i32, i32
  }
  func.func @transform_4(%arg0: i32) -> (i32, i32) {
    %c0_i32 = arith.constant 0 : i32
    %c0_i32_0 = arith.constant 0 : i32
    %c0_i32_1 = arith.constant 0 : i32
    return %c0_i32, %c0_i32_0 : i32, i32
  }
  func.func @transform_5(%arg0: i32) -> (i32, i32) {
    %c0_i32 = arith.constant 0 : i32
    %c0_i32_0 = arith.constant 0 : i32
    %c0_i32_1 = arith.constant 0 : i32
    return %c0_i32, %c0_i32_0 : i32, i32
  }
  func.func @transform_6(%arg0: i32) -> (i32, i32) {
    %c0_i32 = arith.constant 0 : i32
    %c0_i32_0 = arith.constant 0 : i32
    return %arg0, %c0_i32 : i32, i32
  }
}

</mosaic_0001>

<llo_original>
// kernel: tpu_custom_call.1
$region0: #{tpu_custom_call.1}
  #allocation0 [shape = 'u32[]', space=smem, size = 0x4, offset = 0x4, fixed_abs, tag = 'smem constant byte address 0x4 - core index']
  #allocation1 [shape = 'u32[144,128]{1,0:T(1,128)}', space=vmem, size = 0x12000, scoped, tag = 'internal scratch']
  %s0 = inlined_call_operand.hbm [shape: f32[2,4,256], index: 0, kind: input, shape index: {}]
  %s1 = inlined_call_operand.vmem [shape: f32[128,4], index: 1, kind: input, shape index: {}]
  %s2 = inlined_call_operand.vmem [shape: f32[128,128], index: 2, kind: input, shape index: {}]
  %s3 = inlined_call_operand.vmem [shape: f32[1,128], index: 3, kind: input, shape index: {}]
  %s4 = inlined_call_operand.hbm [shape: f32[128,128], index: 4, kind: input, shape index: {}]
  %s5 = inlined_call_operand.vmem [shape: f32[1,128], index: 5, kind: input, shape index: {}]
  %s6 = inlined_call_operand.hbm [shape: f32[2,128], index: 6, kind: output, shape index: {}]
  %s7 = sld [smem:[#allocation0]]
  $region42: #{tpu_custom_call.1} parent=0
    _
  %s9 = ssub.s32 1, %s7
  %s10 = scalar_select 0, %s9, %s7
  $region1: #{tpu_custom_call.1} parent=0
    #allocation2 [shape = 'u8[8192]{0}', space=vmem, size = 0x2000, scoped, tag = 'input window, operand 0, single buffered']
    #allocation3 [shape = 's32[1]{0}', space=sflag, size = 0x4, scoped, tag = 'scoped memory for tpu_custom_call.1']
    #allocation4 [shape = 's32[1]{0}', space=sflag, size = 0x4, scoped, tag = 'scoped memory for tpu_custom_call.1']
    #allocation5 [shape = 'u8[65536]{0}', space=vmem, size = 0x10000, scoped, tag = 'input window, operand 4, single buffered']
    #allocation6 [shape = 's32[1]{0}', space=sflag, size = 0x4, scoped, tag = 'scoped memory for tpu_custom_call.1']
    #allocation7 [shape = 'u8[1024]{0}', space=vmem, size = 0x400, scoped, tag = 'output window, operand 0, single buffered']
    %11 = vsyncpa [#allocation3], 0
    %12 = vsyncpa [#allocation6], 0
    %13 = vsyncpa [#allocation4], 0
    // Predicated region
    $region2: #{tpu_custom_call.1} parent=1 // pred_check
      _
    $region3: #{tpu_custom_call.1} parent=1 // pred_check_branch
      %15 = sbr.rel (0) target = $region5
    $region4: #{tpu_custom_call.1} parent=1 // pred_region
      %s17 = ssub.s32 256, 256
      %18 = vsyncadd [#allocation3], %s17
      %s19 = sshll.u32 [#allocation2], 4
      %s20 = int_to_ptr.vmem [resolvable:$true] %s19
      %25 = dma.hbm_to_vmem [thread:$0]  %s0, 256, %s20, [#allocation3], 128, 128, 8
    $region5: #{tpu_custom_call.1} parent=1 // pred_fallthru
      _
    // Predicated region
    $region6: #{tpu_custom_call.1} parent=1 // pred_check
      _
    $region7: #{tpu_custom_call.1} parent=1 // pred_check_branch
      %27 = sbr.rel (0) target = $region9
    $region8: #{tpu_custom_call.1} parent=1 // pred_region
      _
    $region9: #{tpu_custom_call.1} parent=1 // pred_fallthru
      _
    // Predicated region
    $region10: #{tpu_custom_call.1} parent=1 // pred_check
      _
    $region11: #{tpu_custom_call.1} parent=1 // pred_check_branch
      %29 = sbr.rel (0) target = $region13
    $region12: #{tpu_custom_call.1} parent=1 // pred_region
      _
    $region13: #{tpu_custom_call.1} parent=1 // pred_fallthru
      _
    // Predicated region
    $region14: #{tpu_custom_call.1} parent=1 // pred_check
      _
    $region15: #{tpu_custom_call.1} parent=1 // pred_check_branch
      %31 = sbr.rel (0) target = $region17
    $region16: #{tpu_custom_call.1} parent=1 // pred_region
      _
    $region17: #{tpu_custom_call.1} parent=1 // pred_fallthru
      _
    // Predicated region
    $region18: #{tpu_custom_call.1} parent=1 // pred_check
      _
    $region19: #{tpu_custom_call.1} parent=1 // pred_check_branch
      %33 = sbr.rel (0) target = $region21
    $region20: #{tpu_custom_call.1} parent=1 // pred_region
      %s35 = ssub.s32 2048, 2048
      %36 = vsyncadd [#allocation6], %s35
      %s37 = sshll.u32 [#allocation5], 4
      %s38 = int_to_ptr.vmem [resolvable:$true] %s37
      %43 = dma.hbm_to_vmem [thread:$0]  %s4, 2048, %s38, [#allocation6], 128, 128, 8
    $region21: #{tpu_custom_call.1} parent=1 // pred_fallthru
      _
    // Predicated region
    $region22: #{tpu_custom_call.1} parent=1 // pred_check
      _
    $region23: #{tpu_custom_call.1} parent=1 // pred_check_branch
      %45 = sbr.rel (0) target = $region25
    $region24: #{tpu_custom_call.1} parent=1 // pred_region
      _
    $region25: #{tpu_custom_call.1} parent=1 // pred_fallthru
      _
    // Predicated region
    $region26: #{tpu_custom_call.1} parent=1 // pred_check
      _
    $region27: #{tpu_custom_call.1} parent=1 // pred_check_branch
      %47 = sbr.rel (0) target = $region29
    $region28: #{tpu_custom_call.1} parent=1 // pred_region
      %48 = dma.done [#allocation3], 256
    $region29: #{tpu_custom_call.1} parent=1 // pred_fallthru
      _
    // Predicated region
    $region30: #{tpu_custom_call.1} parent=1 // pred_check
      _
    $region31: #{tpu_custom_call.1} parent=1 // pred_check_branch
      %50 = sbr.rel (0) target = $region33
    $region32: #{tpu_custom_call.1} parent=1 // pred_region
      %51 = dma.done [#allocation6], 2048
    $region33: #{tpu_custom_call.1} parent=1 // pred_fallthru
      _
    %v52 = vld [vmem:[#allocation2] sm:$0xff]
    %v53 = vld [vmem:[#allocation2 + $0x8] sm:$0xff]
    %v54 = vld [vmem:[%s1] sm:$0xff]
    %v55 = vld [vmem:[%s1 + $0x8] sm:$0xff]
    %v56 = vld [vmem:[%s1 + $0x10] sm:$0xff]
    %v57 = vld [vmem:[%s1 + $0x18] sm:$0xff]
    %v58 = vld [vmem:[%s1 + $0x20] sm:$0xff]
    %v59 = vld [vmem:[%s1 + $0x28] sm:$0xff]
    %v60 = vld [vmem:[%s1 + $0x30] sm:$0xff]
    %v61 = vld [vmem:[%s1 + $0x38] sm:$0xff]
    %v62 = vld [vmem:[%s1 + $0x40] sm:$0xff]
    %v63 = vld [vmem:[%s1 + $0x48] sm:$0xff]
    %v64 = vld [vmem:[%s1 + $0x50] sm:$0xff]
    %v65 = vld [vmem:[%s1 + $0x58] sm:$0xff]
    %v66 = vld [vmem:[%s1 + $0x60] sm:$0xff]
    %v67 = vld [vmem:[%s1 + $0x68] sm:$0xff]
    %v68 = vld [vmem:[%s1 + $0x70] sm:$0xff]
    %v69 = vld [vmem:[%s1 + $0x78] sm:$0xff]
    %71 = vset.pattern.permute.xlu0 0
    %72 = vperm.xlu0 %71, %v54
    %v73 = vpop.permute.xlu0 %72
    %76 = vset.pattern.permute.xlu0 0
    %77 = vperm.xlu0 %76, %v55
    %v78 = vpop.permute.xlu0 %77
    %81 = vset.pattern.permute.xlu0 0
    %82 = vperm.xlu0 %81, %v56
    %v83 = vpop.permute.xlu0 %82
    %86 = vset.pattern.permute.xlu0 0
    %87 = vperm.xlu0 %86, %v57
    %v88 = vpop.permute.xlu0 %87
    %91 = vset.pattern.permute.xlu0 0
    %92 = vperm.xlu0 %91, %v58
    %v93 = vpop.permute.xlu0 %92
    %96 = vset.pattern.permute.xlu0 0
    %97 = vperm.xlu0 %96, %v59
    %v98 = vpop.permute.xlu0 %97
    %101 = vset.pattern.permute.xlu0 0
    %102 = vperm.xlu0 %101, %v60
    %v103 = vpop.permute.xlu0 %102
    %106 = vset.pattern.permute.xlu0 0
    %107 = vperm.xlu0 %106, %v61
    %v108 = vpop.permute.xlu0 %107
    %111 = vset.pattern.permute.xlu0 0
    %112 = vperm.xlu0 %111, %v62
    %v113 = vpop.permute.xlu0 %112
    %116 = vset.pattern.permute.xlu0 0
    %117 = vperm.xlu0 %116, %v63
    %v118 = vpop.permute.xlu0 %117
    %121 = vset.pattern.permute.xlu0 0
    %122 = vperm.xlu0 %121, %v64
    %v123 = vpop.permute.xlu0 %122
    %126 = vset.pattern.permute.xlu0 0
    %127 = vperm.xlu0 %126, %v65
    %v128 = vpop.permute.xlu0 %127
    %131 = vset.pattern.permute.xlu0 0
    %132 = vperm.xlu0 %131, %v66
    %v133 = vpop.permute.xlu0 %132
    %136 = vset.pattern.permute.xlu0 0
    %137 = vperm.xlu0 %136, %v67
    %v138 = vpop.permute.xlu0 %137
    %141 = vset.pattern.permute.xlu0 0
    %142 = vperm.xlu0 %141, %v68
    %v143 = vpop.permute.xlu0 %142
    %146 = vset.pattern.permute.xlu0 0
    %147 = vperm.xlu0 %146, %v69
    %v148 = vpop.permute.xlu0 %147
    %v152 = vlaneseq
    %v153 = vshrl.u32 %v152, 7
    %v154 = vsub.s32 0, %v153
    %v155 = vrot.slane %v52, %v154
    %v156 = vlaneseq
    %v157 = vshrl.u32 %v156, 7
    %v158 = vsub.s32 4, %v157
    %v159 = vrot.slane %v52, %v158
    %v160 = vlaneseq
    %v161 = vshrl.u32 %v160, 7
    %v162 = vsub.s32 0, %v161
    %v163 = vrot.slane %v53, %v162
    %v164 = vlaneseq
    %v165 = vshrl.u32 %v164, 7
    %v166 = vsub.s32 4, %v165
    %v167 = vrot.slane %v53, %v166
    %v172 = vlaneseq
    %v173 = vshrl.u32 %v172, 7
    %v174 = vsub.s32 0, %v173
    %v175 = vrot.slane %v155, %v174
    %v176 = vlaneseq
    %v177 = vshrl.u32 %v176, 7
    %v178 = vsub.s32 0, %v177
    %v179 = vrot.slane %v159, %v178
    %v180 = vlaneseq
    %v181 = vshrl.u32 %v180, 7
    %v182 = vsub.s32 0, %v181
    %v183 = vrot.slane %v163, %v182
    %v184 = vlaneseq
    %v185 = vshrl.u32 %v184, 7
    %v186 = vsub.s32 0, %v185
    %v187 = vrot.slane %v167, %v186
    %v188 = vmul.f32 %v73, %v175
    %v189 = vmul.f32 %v73, %v179
    %v190 = vmul.f32 %v78, %v175
    %v191 = vmul.f32 %v78, %v179
    %v192 = vmul.f32 %v83, %v175
    %v193 = vmul.f32 %v83, %v179
    %v194 = vmul.f32 %v88, %v175
    %v195 = vmul.f32 %v88, %v179
    %v196 = vmul.f32 %v93, %v175
    %v197 = vmul.f32 %v93, %v179
    %v198 = vmul.f32 %v98, %v175
    %v199 = vmul.f32 %v98, %v179
    %v200 = vmul.f32 %v103, %v175
    %v201 = vmul.f32 %v103, %v179
    %v202 = vmul.f32 %v108, %v175
    %v203 = vmul.f32 %v108, %v179
    %v204 = vmul.f32 %v113, %v175
    %v205 = vmul.f32 %v113, %v179
    %v206 = vmul.f32 %v118, %v175
    %v207 = vmul.f32 %v118, %v179
    %v208 = vmul.f32 %v123, %v175
    %v209 = vmul.f32 %v123, %v179
    %v210 = vmul.f32 %v128, %v175
    %v211 = vmul.f32 %v128, %v179
    %v212 = vmul.f32 %v133, %v175
    %v213 = vmul.f32 %v133, %v179
    %v214 = vmul.f32 %v138, %v175
    %v215 = vmul.f32 %v138, %v179
    %v216 = vmul.f32 %v143, %v175
    %v217 = vmul.f32 %v143, %v179
    %v218 = vmul.f32 %v148, %v175
    %v219 = vmul.f32 %v148, %v179
    %v220 = vmul.f32 %v73, %v183
    %v221 = vmul.f32 %v73, %v187
    %v222 = vmul.f32 %v78, %v183
    %v223 = vmul.f32 %v78, %v187
    %v224 = vmul.f32 %v83, %v183
    %v225 = vmul.f32 %v83, %v187
    %v226 = vmul.f32 %v88, %v183
    %v227 = vmul.f32 %v88, %v187
    %v228 = vmul.f32 %v93, %v183
    %v229 = vmul.f32 %v93, %v187
    %v230 = vmul.f32 %v98, %v183
    %v231 = vmul.f32 %v98, %v187
    %v232 = vmul.f32 %v103, %v183
    %v233 = vmul.f32 %v103, %v187
    %v234 = vmul.f32 %v108, %v183
    %v235 = vmul.f32 %v108, %v187
    %v236 = vmul.f32 %v113, %v183
    %v237 = vmul.f32 %v113, %v187
    %v238 = vmul.f32 %v118, %v183
    %v239 = vmul.f32 %v118, %v187
    %v240 = vmul.f32 %v123, %v183
    %v241 = vmul.f32 %v123, %v187
    %v242 = vmul.f32 %v128, %v183
    %v243 = vmul.f32 %v128, %v187
    %v244 = vmul.f32 %v133, %v183
    %v245 = vmul.f32 %v133, %v187
    %v246 = vmul.f32 %v138, %v183
    %v247 = vmul.f32 %v138, %v187
    %v248 = vmul.f32 %v143, %v183
    %v249 = vmul.f32 %v143, %v187
    %v250 = vmul.f32 %v148, %v183
    %v251 = vmul.f32 %v148, %v187
    %252 = vset.pattern.permute.xlu0 1
    %253 = vperm.xlu0 %252, %v54
    %v254 = vpop.permute.xlu0 %253
    %256 = vset.pattern.permute.xlu0 1
    %257 = vperm.xlu0 %256, %v55
    %v258 = vpop.permute.xlu0 %257
    %260 = vset.pattern.permute.xlu0 1
    %261 = vperm.xlu0 %260, %v56
    %v262 = vpop.permute.xlu0 %261
    %264 = vset.pattern.permute.xlu0 1
    %265 = vperm.xlu0 %264, %v57
    %v266 = vpop.permute.xlu0 %265
    %268 = vset.pattern.permute.xlu0 1
    %269 = vperm.xlu0 %268, %v58
    %v270 = vpop.permute.xlu0 %269
    %272 = vset.pattern.permute.xlu0 1
    %273 = vperm.xlu0 %272, %v59
    %v274 = vpop.permute.xlu0 %273
    %276 = vset.pattern.permute.xlu0 1
    %277 = vperm.xlu0 %276, %v60
    %v278 = vpop.permute.xlu0 %277
    %280 = vset.pattern.permute.xlu0 1
    %281 = vperm.xlu0 %280, %v61
    %v282 = vpop.permute.xlu0 %281
    %284 = vset.pattern.permute.xlu0 1
    %285 = vperm.xlu0 %284, %v62
    %v286 = vpop.permute.xlu0 %285
    %288 = vset.pattern.permute.xlu0 1
    %289 = vperm.xlu0 %288, %v63
    %v290 = vpop.permute.xlu0 %289
    %292 = vset.pattern.permute.xlu0 1
    %293 = vperm.xlu0 %292, %v64
    %v294 = vpop.permute.xlu0 %293
    %296 = vset.pattern.permute.xlu0 1
    %297 = vperm.xlu0 %296, %v65
    %v298 = vpop.permute.xlu0 %297
    %300 = vset.pattern.permute.xlu0 1
    %301 = vperm.xlu0 %300, %v66
    %v302 = vpop.permute.xlu0 %301
    %304 = vset.pattern.permute.xlu0 1
    %305 = vperm.xlu0 %304, %v67
    %v306 = vpop.permute.xlu0 %305
    %308 = vset.pattern.permute.xlu0 1
    %309 = vperm.xlu0 %308, %v68
    %v310 = vpop.permute.xlu0 %309
    %312 = vset.pattern.permute.xlu0 1
    %313 = vperm.xlu0 %312, %v69
    %v314 = vpop.permute.xlu0 %313
    %v316 = vlaneseq
    %v317 = vshrl.u32 %v316, 7
    %v318 = vsub.s32 1, %v317
    %v319 = vrot.slane %v52, %v318
    %v320 = vlaneseq
    %v321 = vshrl.u32 %v320, 7
    %v322 = vsub.s32 5, %v321
    %v323 = vrot.slane %v52, %v322
    %v324 = vlaneseq
    %v325 = vshrl.u32 %v324, 7
    %v326 = vsub.s32 1, %v325
    %v327 = vrot.slane %v53, %v326
    %v328 = vlaneseq
    %v329 = vshrl.u32 %v328, 7
    %v330 = vsub.s32 5, %v329
    %v331 = vrot.slane %v53, %v330
    %v336 = vlaneseq
    %v337 = vshrl.u32 %v336, 7
    %v338 = vsub.s32 1, %v337
    %v339 = vrot.slane %v319, %v338
    %v340 = vlaneseq
    %v341 = vshrl.u32 %v340, 7
    %v342 = vsub.s32 1, %v341
    %v343 = vrot.slane %v323, %v342
    %v344 = vlaneseq
    %v345 = vshrl.u32 %v344, 7
    %v346 = vsub.s32 1, %v345
    %v347 = vrot.slane %v327, %v346
    %v348 = vlaneseq
    %v349 = vshrl.u32 %v348, 7
    %v350 = vsub.s32 1, %v349
    %v351 = vrot.slane %v331, %v350
    %v352 = vmul.f32 %v254, %v339
    %v353 = vmul.f32 %v254, %v343
    %v354 = vmul.f32 %v258, %v339
    %v355 = vmul.f32 %v258, %v343
    %v356 = vmul.f32 %v262, %v339
    %v357 = vmul.f32 %v262, %v343
    %v358 = vmul.f32 %v266, %v339
    %v359 = vmul.f32 %v266, %v343
    %v360 = vmul.f32 %v270, %v339
    %v361 = vmul.f32 %v270, %v343
    %v362 = vmul.f32 %v274, %v339
    %v363 = vmul.f32 %v274, %v343
    %v364 = vmul.f32 %v278, %v339
    %v365 = vmul.f32 %v278, %v343
    %v366 = vmul.f32 %v282, %v339
    %v367 = vmul.f32 %v282, %v343
    %v368 = vmul.f32 %v286, %v339
    %v369 = vmul.f32 %v286, %v343
    %v370 = vmul.f32 %v290, %v339
    %v371 = vmul.f32 %v290, %v343
    %v372 = vmul.f32 %v294, %v339
    %v373 = vmul.f32 %v294, %v343
    %v374 = vmul.f32 %v298, %v339
    %v375 = vmul.f32 %v298, %v343
    %v376 = vmul.f32 %v302, %v339
    %v377 = vmul.f32 %v302, %v343
    %v378 = vmul.f32 %v306, %v339
    %v379 = vmul.f32 %v306, %v343
    %v380 = vmul.f32 %v310, %v339
    %v381 = vmul.f32 %v310, %v343
    %v382 = vmul.f32 %v314, %v339
    %v383 = vmul.f32 %v314, %v343
    %v384 = vmul.f32 %v254, %v347
    %v385 = vmul.f32 %v254, %v351
    %v386 = vmul.f32 %v258, %v347
    %v387 = vmul.f32 %v258, %v351
    %v388 = vmul.f32 %v262, %v347
    %v389 = vmul.f32 %v262, %v351
    %v390 = vmul.f32 %v266, %v347
    %v391 = vmul.f32 %v266, %v351
    %v392 = vmul.f32 %v270, %v347
    %v393 = vmul.f32 %v270, %v351
    %v394 = vmul.f32 %v274, %v347
    %v395 = vmul.f32 %v274, %v351
    %v396 = vmul.f32 %v278, %v347
    %v397 = vmul.f32 %v278, %v351
    %v398 = vmul.f32 %v282, %v347
    %v399 = vmul.f32 %v282, %v351
    %v400 = vmul.f32 %v286, %v347
    %v401 = vmul.f32 %v286, %v351
    %v402 = vmul.f32 %v290, %v347
    %v403 = vmul.f32 %v290, %v351
    %v404 = vmul.f32 %v294, %v347
    %v405 = vmul.f32 %v294, %v351
    %v406 = vmul.f32 %v298, %v347
    %v407 = vmul.f32 %v298, %v351
    %v408 = vmul.f32 %v302, %v347
    %v409 = vmul.f32 %v302, %v351
    %v410 = vmul.f32 %v306, %v347
    %v411 = vmul.f32 %v306, %v351
    %v412 = vmul.f32 %v310, %v347
    %v413 = vmul.f32 %v310, %v351
    %v414 = vmul.f32 %v314, %v347
    %v415 = vmul.f32 %v314, %v351
    %v416 = vadd.f32 %v188, %v352
    %v417 = vadd.f32 %v189, %v353
    %v418 = vadd.f32 %v190, %v354
    %v419 = vadd.f32 %v191, %v355
    %v420 = vadd.f32 %v192, %v356
    %v421 = vadd.f32 %v193, %v357
    %v422 = vadd.f32 %v194, %v358
    %v423 = vadd.f32 %v195, %v359
    %v424 = vadd.f32 %v196, %v360
    %v425 = vadd.f32 %v197, %v361
    %v426 = vadd.f32 %v198, %v362
    %v427 = vadd.f32 %v199, %v363
    %v428 = vadd.f32 %v200, %v364
    %v429 = vadd.f32 %v201, %v365
    %v430 = vadd.f32 %v202, %v366
    %v431 = vadd.f32 %v203, %v367
    %v432 = vadd.f32 %v204, %v368
    %v433 = vadd.f32 %v205, %v369
    %v434 = vadd.f32 %v206, %v370
    %v435 = vadd.f32 %v207, %v371
    %v436 = vadd.f32 %v208, %v372
    %v437 = vadd.f32 %v209, %v373
    %v438 = vadd.f32 %v210, %v374
    %v439 = vadd.f32 %v211, %v375
    %v440 = vadd.f32 %v212, %v376
    %v441 = vadd.f32 %v213, %v377
    %v442 = vadd.f32 %v214, %v378
    %v443 = vadd.f32 %v215, %v379
    %v444 = vadd.f32 %v216, %v380
    %v445 = vadd.f32 %v217, %v381
    %v446 = vadd.f32 %v218, %v382
    %v447 = vadd.f32 %v219, %v383
    %v448 = vadd.f32 %v220, %v384
    %v449 = vadd.f32 %v221, %v385
    %v450 = vadd.f32 %v222, %v386
    %v451 = vadd.f32 %v223, %v387
    %v452 = vadd.f32 %v224, %v388
    %v453 = vadd.f32 %v225, %v389
    %v454 = vadd.f32 %v226, %v390
    %v455 = vadd.f32 %v227, %v391
    %v456 = vadd.f32 %v228, %v392
    %v457 = vadd.f32 %v229, %v393
    %v458 = vadd.f32 %v230, %v394
    %v459 = vadd.f32 %v231, %v395
    %v460 = vadd.f32 %v232, %v396
    %v461 = vadd.f32 %v233, %v397
    %v462 = vadd.f32 %v234, %v398
    %v463 = vadd.f32 %v235, %v399
    %v464 = vadd.f32 %v236, %v400
    %v465 = vadd.f32 %v237, %v401
    %v466 = vadd.f32 %v238, %v402
    %v467 = vadd.f32 %v239, %v403
    %v468 = vadd.f32 %v240, %v404
    %v469 = vadd.f32 %v241, %v405
    %v470 = vadd.f32 %v242, %v406
    %v471 = vadd.f32 %v243, %v407
    %v472 = vadd.f32 %v244, %v408
    %v473 = vadd.f32 %v245, %v409
    %v474 = vadd.f32 %v246, %v410
    %v475 = vadd.f32 %v247, %v411
    %v476 = vadd.f32 %v248, %v412
    %v477 = vadd.f32 %v249, %v413
    %v478 = vadd.f32 %v250, %v414
    %v479 = vadd.f32 %v251, %v415
    %480 = vset.pattern.permute.xlu0 2
    %481 = vperm.xlu0 %480, %v54
    %v482 = vpop.permute.xlu0 %481
    %484 = vset.pattern.permute.xlu0 2
    %485 = vperm.xlu0 %484, %v55
    %v486 = vpop.permute.xlu0 %485
    %488 = vset.pattern.permute.xlu0 2
    %489 = vperm.xlu0 %488, %v56
    %v490 = vpop.permute.xlu0 %489
    %492 = vset.pattern.permute.xlu0 2
    %493 = vperm.xlu0 %492, %v57
    %v494 = vpop.permute.xlu0 %493
    %496 = vset.pattern.permute.xlu0 2
    %497 = vperm.xlu0 %496, %v58
    %v498 = vpop.permute.xlu0 %497
    %500 = vset.pattern.permute.xlu0 2
    %501 = vperm.xlu0 %500, %v59
    %v502 = vpop.permute.xlu0 %501
    %504 = vset.pattern.permute.xlu0 2
    %505 = vperm.xlu0 %504, %v60
    %v506 = vpop.permute.xlu0 %505
    %508 = vset.pattern.permute.xlu0 2
    %509 = vperm.xlu0 %508, %v61
    %v510 = vpop.permute.xlu0 %509
    %512 = vset.pattern.permute.xlu0 2
    %513 = vperm.xlu0 %512, %v62
    %v514 = vpop.permute.xlu0 %513
    %516 = vset.pattern.permute.xlu0 2
    %517 = vperm.xlu0 %516, %v63
    %v518 = vpop.permute.xlu0 %517
    %520 = vset.pattern.permute.xlu0 2
    %521 = vperm.xlu0 %520, %v64
    %v522 = vpop.permute.xlu0 %521
    %524 = vset.pattern.permute.xlu0 2
    %525 = vperm.xlu0 %524, %v65
    %v526 = vpop.permute.xlu0 %525
    %528 = vset.pattern.permute.xlu0 2
    %529 = vperm.xlu0 %528, %v66
    %v530 = vpop.permute.xlu0 %529
    %532 = vset.pattern.permute.xlu0 2
    %533 = vperm.xlu0 %532, %v67
    %v534 = vpop.permute.xlu0 %533
    %536 = vset.pattern.permute.xlu0 2
    %537 = vperm.xlu0 %536, %v68
    %v538 = vpop.permute.xlu0 %537
    %540 = vset.pattern.permute.xlu0 2
    %541 = vperm.xlu0 %540, %v69
    %v542 = vpop.permute.xlu0 %541
    %v544 = vlaneseq
    %v545 = vshrl.u32 %v544, 7
    %v546 = vsub.s32 2, %v545
    %v547 = vrot.slane %v52, %v546
    %v548 = vlaneseq
    %v549 = vshrl.u32 %v548, 7
    %v550 = vsub.s32 6, %v549
    %v551 = vrot.slane %v52, %v550
    %v552 = vlaneseq
    %v553 = vshrl.u32 %v552, 7
    %v554 = vsub.s32 2, %v553
    %v555 = vrot.slane %v53, %v554
    %v556 = vlaneseq
    %v557 = vshrl.u32 %v556, 7
    %v558 = vsub.s32 6, %v557
    %v559 = vrot.slane %v53, %v558
    %v564 = vlaneseq
    %v565 = vshrl.u32 %v564, 7
    %v566 = vsub.s32 2, %v565
    %v567 = vrot.slane %v547, %v566
    %v568 = vlaneseq
    %v569 = vshrl.u32 %v568, 7
    %v570 = vsub.s32 2, %v569
    %v571 = vrot.slane %v551, %v570
    %v572 = vlaneseq
    %v573 = vshrl.u32 %v572, 7
    %v574 = vsub.s32 2, %v573
    %v575 = vrot.slane %v555, %v574
    %v576 = vlaneseq
    %v577 = vshrl.u32 %v576, 7
    %v578 = vsub.s32 2, %v577
    %v579 = vrot.slane %v559, %v578
    %v580 = vmul.f32 %v482, %v567
    %v581 = vmul.f32 %v482, %v571
    %v582 = vmul.f32 %v486, %v567
    %v583 = vmul.f32 %v486, %v571
    %v584 = vmul.f32 %v490, %v567
    %v585 = vmul.f32 %v490, %v571
    %v586 = vmul.f32 %v494, %v567
    %v587 = vmul.f32 %v494, %v571
    %v588 = vmul.f32 %v498, %v567
    %v589 = vmul.f32 %v498, %v571
    %v590 = vmul.f32 %v502, %v567
    %v591 = vmul.f32 %v502, %v571
    %v592 = vmul.f32 %v506, %v567
    %v593 = vmul.f32 %v506, %v571
    %v594 = vmul.f32 %v510, %v567
    %v595 = vmul.f32 %v510, %v571
    %v596 = vmul.f32 %v514, %v567
    %v597 = vmul.f32 %v514, %v571
    %v598 = vmul.f32 %v518, %v567
    %v599 = vmul.f32 %v518, %v571
    %v600 = vmul.f32 %v522, %v567
    %v601 = vmul.f32 %v522, %v571
    %v602 = vmul.f32 %v526, %v567
    %v603 = vmul.f32 %v526, %v571
    %v604 = vmul.f32 %v530, %v567
    %v605 = vmul.f32 %v530, %v571
    %v606 = vmul.f32 %v534, %v567
    %v607 = vmul.f32 %v534, %v571
    %v608 = vmul.f32 %v538, %v567
    %v609 = vmul.f32 %v538, %v571
    %v610 = vmul.f32 %v542, %v567
    %v611 = vmul.f32 %v542, %v571
    %v612 = vmul.f32 %v482, %v575
    %v613 = vmul.f32 %v482, %v579
    %v614 = vmul.f32 %v486, %v575
    %v615 = vmul.f32 %v486, %v579
    %v616 = vmul.f32 %v490, %v575
    %v617 = vmul.f32 %v490, %v579
    %v618 = vmul.f32 %v494, %v575
    %v619 = vmul.f32 %v494, %v579
    %v620 = vmul.f32 %v498, %v575
    %v621 = vmul.f32 %v498, %v579
    %v622 = vmul.f32 %v502, %v575
    %v623 = vmul.f32 %v502, %v579
    %v624 = vmul.f32 %v506, %v575
    %v625 = vmul.f32 %v506, %v579
    %v626 = vmul.f32 %v510, %v575
    %v627 = vmul.f32 %v510, %v579
    %v628 = vmul.f32 %v514, %v575
    %v629 = vmul.f32 %v514, %v579
    %v630 = vmul.f32 %v518, %v575
    %v631 = vmul.f32 %v518, %v579
    %v632 = vmul.f32 %v522, %v575
    %v633 = vmul.f32 %v522, %v579
    %v634 = vmul.f32 %v526, %v575
    %v635 = vmul.f32 %v526, %v579
    %v636 = vmul.f32 %v530, %v575
    %v637 = vmul.f32 %v530, %v579
    %v638 = vmul.f32 %v534, %v575
    %v639 = vmul.f32 %v534, %v579
    %v640 = vmul.f32 %v538, %v575
    %v641 = vmul.f32 %v538, %v579
    %v642 = vmul.f32 %v542, %v575
    %v643 = vmul.f32 %v542, %v579
    %v644 = vadd.f32 %v416, %v580
    %v645 = vadd.f32 %v417, %v581
    %v646 = vadd.f32 %v418, %v582
    %v647 = vadd.f32 %v419, %v583
    %v648 = vadd.f32 %v420, %v584
    %v649 = vadd.f32 %v421, %v585
    %v650 = vadd.f32 %v422, %v586
    %v651 = vadd.f32 %v423, %v587
    %v652 = vadd.f32 %v424, %v588
    %v653 = vadd.f32 %v425, %v589
    %v654 = vadd.f32 %v426, %v590
    %v655 = vadd.f32 %v427, %v591
    %v656 = vadd.f32 %v428, %v592
    %v657 = vadd.f32 %v429, %v593
    %v658 = vadd.f32 %v430, %v594
    %v659 = vadd.f32 %v431, %v595
    %v660 = vadd.f32 %v432, %v596
    %v661 = vadd.f32 %v433, %v597
    %v662 = vadd.f32 %v434, %v598
    %v663 = vadd.f32 %v435, %v599
    %v664 = vadd.f32 %v436, %v600
    %v665 = vadd.f32 %v437, %v601
    %v666 = vadd.f32 %v438, %v602
    %v667 = vadd.f32 %v439, %v603
    %v668 = vadd.f32 %v440, %v604
    %v669 = vadd.f32 %v441, %v605
    %v670 = vadd.f32 %v442, %v606
    %v671 = vadd.f32 %v443, %v607
    %v672 = vadd.f32 %v444, %v608
    %v673 = vadd.f32 %v445, %v609
    %v674 = vadd.f32 %v446, %v610
    %v675 = vadd.f32 %v447, %v611
    %v676 = vadd.f32 %v448, %v612
    %v677 = vadd.f32 %v449, %v613
    %v678 = vadd.f32 %v450, %v614
    %v679 = vadd.f32 %v451, %v615
    %v680 = vadd.f32 %v452, %v616
    %v681 = vadd.f32 %v453, %v617
    %v682 = vadd.f32 %v454, %v618
    %v683 = vadd.f32 %v455, %v619
    %v684 = vadd.f32 %v456, %v620
    %v685 = vadd.f32 %v457, %v621
    %v686 = vadd.f32 %v458, %v622
    %v687 = vadd.f32 %v459, %v623
    %v688 = vadd.f32 %v460, %v624
    %v689 = vadd.f32 %v461, %v625
    %v690 = vadd.f32 %v462, %v626
    %v691 = vadd.f32 %v463, %v627
    %v692 = vadd.f32 %v464, %v628
    %v693 = vadd.f32 %v465, %v629
    %v694 = vadd.f32 %v466, %v630
    %v695 = vadd.f32 %v467, %v631
    %v696 = vadd.f32 %v468, %v632
    %v697 = vadd.f32 %v469, %v633
    %v698 = vadd.f32 %v470, %v634
    %v699 = vadd.f32 %v471, %v635
    %v700 = vadd.f32 %v472, %v636
    %v701 = vadd.f32 %v473, %v637
    %v702 = vadd.f32 %v474, %v638
    %v703 = vadd.f32 %v475, %v639
    %v704 = vadd.f32 %v476, %v640
    %v705 = vadd.f32 %v477, %v641
    %v706 = vadd.f32 %v478, %v642
    %v707 = vadd.f32 %v479, %v643
    %708 = vset.pattern.permute.xlu0 3
    %709 = vperm.xlu0 %708, %v54
    %v710 = vpop.permute.xlu0 %709
    %712 = vset.pattern.permute.xlu0 3
    %713 = vperm.xlu0 %712, %v55
    %v714 = vpop.permute.xlu0 %713
    %716 = vset.pattern.permute.xlu0 3
    %717 = vperm.xlu0 %716, %v56
    %v718 = vpop.permute.xlu0 %717
    %720 = vset.pattern.permute.xlu0 3
    %721 = vperm.xlu0 %720, %v57
    %v722 = vpop.permute.xlu0 %721
    %724 = vset.pattern.permute.xlu0 3
    %725 = vperm.xlu0 %724, %v58
    %v726 = vpop.permute.xlu0 %725
    %728 = vset.pattern.permute.xlu0 3
    %729 = vperm.xlu0 %728, %v59
    %v730 = vpop.permute.xlu0 %729
    %732 = vset.pattern.permute.xlu0 3
    %733 = vperm.xlu0 %732, %v60
    %v734 = vpop.permute.xlu0 %733
    %736 = vset.pattern.permute.xlu0 3
    %737 = vperm.xlu0 %736, %v61
    %v738 = vpop.permute.xlu0 %737
    %740 = vset.pattern.permute.xlu0 3
    %741 = vperm.xlu0 %740, %v62
    %v742 = vpop.permute.xlu0 %741
    %744 = vset.pattern.permute.xlu0 3
    %745 = vperm.xlu0 %744, %v63
    %v746 = vpop.permute.xlu0 %745
    %748 = vset.pattern.permute.xlu0 3
    %749 = vperm.xlu0 %748, %v64
    %v750 = vpop.permute.xlu0 %749
    %752 = vset.pattern.permute.xlu0 3
    %753 = vperm.xlu0 %752, %v65
    %v754 = vpop.permute.xlu0 %753
    %756 = vset.pattern.permute.xlu0 3
    %757 = vperm.xlu0 %756, %v66
    %v758 = vpop.permute.xlu0 %757
    %760 = vset.pattern.permute.xlu0 3
    %761 = vperm.xlu0 %760, %v67
    %v762 = vpop.permute.xlu0 %761
    %764 = vset.pattern.permute.xlu0 3
    %765 = vperm.xlu0 %764, %v68
    %v766 = vpop.permute.xlu0 %765
    %768 = vset.pattern.permute.xlu0 3
    %769 = vperm.xlu0 %768, %v69
    %v770 = vpop.permute.xlu0 %769
    %v772 = vlaneseq
    %v773 = vshrl.u32 %v772, 7
    %v774 = vsub.s32 3, %v773
    %v775 = vrot.slane %v52, %v774
    %v776 = vlaneseq
    %v777 = vshrl.u32 %v776, 7
    %v778 = vsub.s32 7, %v777
    %v779 = vrot.slane %v52, %v778
    %v780 = vlaneseq
    %v781 = vshrl.u32 %v780, 7
    %v782 = vsub.s32 3, %v781
    %v783 = vrot.slane %v53, %v782
    %v784 = vlaneseq
    %v785 = vshrl.u32 %v784, 7
    %v786 = vsub.s32 7, %v785
    %v787 = vrot.slane %v53, %v786
    %v792 = vlaneseq
    %v793 = vshrl.u32 %v792, 7
    %v794 = vsub.s32 3, %v793
    %v795 = vrot.slane %v775, %v794
    %v796 = vlaneseq
    %v797 = vshrl.u32 %v796, 7
    %v798 = vsub.s32 3, %v797
    %v799 = vrot.slane %v779, %v798
    %v800 = vlaneseq
    %v801 = vshrl.u32 %v800, 7
    %v802 = vsub.s32 3, %v801
    %v803 = vrot.slane %v783, %v802
    %v804 = vlaneseq
    %v805 = vshrl.u32 %v804, 7
    %v806 = vsub.s32 3, %v805
    %v807 = vrot.slane %v787, %v806
    %v808 = vmul.f32 %v710, %v795
    %v809 = vmul.f32 %v710, %v799
    %v810 = vmul.f32 %v714, %v795
    %v811 = vmul.f32 %v714, %v799
    %v812 = vmul.f32 %v718, %v795
    %v813 = vmul.f32 %v718, %v799
    %v814 = vmul.f32 %v722, %v795
    %v815 = vmul.f32 %v722, %v799
    %v816 = vmul.f32 %v726, %v795
    %v817 = vmul.f32 %v726, %v799
    %v818 = vmul.f32 %v730, %v795
    %v819 = vmul.f32 %v730, %v799
    %v820 = vmul.f32 %v734, %v795
    %v821 = vmul.f32 %v734, %v799
    %v822 = vmul.f32 %v738, %v795
    %v823 = vmul.f32 %v738, %v799
    %v824 = vmul.f32 %v742, %v795
    %v825 = vmul.f32 %v742, %v799
    %v826 = vmul.f32 %v746, %v795
    %v827 = vmul.f32 %v746, %v799
    %v828 = vmul.f32 %v750, %v795
    %v829 = vmul.f32 %v750, %v799
    %v830 = vmul.f32 %v754, %v795
    %v831 = vmul.f32 %v754, %v799
    %v832 = vmul.f32 %v758, %v795
    %v833 = vmul.f32 %v758, %v799
    %v834 = vmul.f32 %v762, %v795
    %v835 = vmul.f32 %v762, %v799
    %v836 = vmul.f32 %v766, %v795
    %v837 = vmul.f32 %v766, %v799
    %v838 = vmul.f32 %v770, %v795
    %v839 = vmul.f32 %v770, %v799
    %v840 = vmul.f32 %v710, %v803
    %v841 = vmul.f32 %v710, %v807
    %v842 = vmul.f32 %v714, %v803
    %v843 = vmul.f32 %v714, %v807
    %v844 = vmul.f32 %v718, %v803
    %v845 = vmul.f32 %v718, %v807
    %v846 = vmul.f32 %v722, %v803
    %v847 = vmul.f32 %v722, %v807
    %v848 = vmul.f32 %v726, %v803
    %v849 = vmul.f32 %v726, %v807
    %v850 = vmul.f32 %v730, %v803
    %v851 = vmul.f32 %v730, %v807
    %v852 = vmul.f32 %v734, %v803
    %v853 = vmul.f32 %v734, %v807
    %v854 = vmul.f32 %v738, %v803
    %v855 = vmul.f32 %v738, %v807
    %v856 = vmul.f32 %v742, %v803
    %v857 = vmul.f32 %v742, %v807
    %v858 = vmul.f32 %v746, %v803
    %v859 = vmul.f32 %v746, %v807
    %v860 = vmul.f32 %v750, %v803
    %v861 = vmul.f32 %v750, %v807
    %v862 = vmul.f32 %v754, %v803
    %v863 = vmul.f32 %v754, %v807
    %v864 = vmul.f32 %v758, %v803
    %v865 = vmul.f32 %v758, %v807
    %v866 = vmul.f32 %v762, %v803
    %v867 = vmul.f32 %v762, %v807
    %v868 = vmul.f32 %v766, %v803
    %v869 = vmul.f32 %v766, %v807
    %v870 = vmul.f32 %v770, %v803
    %v871 = vmul.f32 %v770, %v807
    %v872 = vadd.f32 %v644, %v808
    %v873 = vadd.f32 %v645, %v809
    %v874 = vadd.f32 %v646, %v810
    %v875 = vadd.f32 %v647, %v811
    %v876 = vadd.f32 %v648, %v812
    %v877 = vadd.f32 %v649, %v813
    %v878 = vadd.f32 %v650, %v814
    %v879 = vadd.f32 %v651, %v815
    %v880 = vadd.f32 %v652, %v816
    %v881 = vadd.f32 %v653, %v817
    %v882 = vadd.f32 %v654, %v818
    %v883 = vadd.f32 %v655, %v819
    %v884 = vadd.f32 %v656, %v820
    %v885 = vadd.f32 %v657, %v821
    %v886 = vadd.f32 %v658, %v822
    %v887 = vadd.f32 %v659, %v823
    %v888 = vadd.f32 %v660, %v824
    %v889 = vadd.f32 %v661, %v825
    %v890 = vadd.f32 %v662, %v826
    %v891 = vadd.f32 %v663, %v827
    %v892 = vadd.f32 %v664, %v828
    %v893 = vadd.f32 %v665, %v829
    %v894 = vadd.f32 %v666, %v830
    %v895 = vadd.f32 %v667, %v831
    %v896 = vadd.f32 %v668, %v832
    %v897 = vadd.f32 %v669, %v833
    %v898 = vadd.f32 %v670, %v834
    %v899 = vadd.f32 %v671, %v835
    %v900 = vadd.f32 %v672, %v836
    %v901 = vadd.f32 %v673, %v837
    %v902 = vadd.f32 %v674, %v838
    %v903 = vadd.f32 %v675, %v839
    %v904 = vadd.f32 %v676, %v840
    %v905 = vadd.f32 %v677, %v841
    %v906 = vadd.f32 %v678, %v842
    %v907 = vadd.f32 %v679, %v843
    %v908 = vadd.f32 %v680, %v844
    %v909 = vadd.f32 %v681, %v845
    %v910 = vadd.f32 %v682, %v846
    %v911 = vadd.f32 %v683, %v847
    %v912 = vadd.f32 %v684, %v848
    %v913 = vadd.f32 %v685, %v849
    %v914 = vadd.f32 %v686, %v850
    %v915 = vadd.f32 %v687, %v851
    %v916 = vadd.f32 %v688, %v852
    %v917 = vadd.f32 %v689, %v853
    %v918 = vadd.f32 %v690, %v854
    %v919 = vadd.f32 %v691, %v855
    %v920 = vadd.f32 %v692, %v856
    %v921 = vadd.f32 %v693, %v857
    %v922 = vadd.f32 %v694, %v858
    %v923 = vadd.f32 %v695, %v859
    %v924 = vadd.f32 %v696, %v860
    %v925 = vadd.f32 %v697, %v861
    %v926 = vadd.f32 %v698, %v862
    %v927 = vadd.f32 %v699, %v863
    %v928 = vadd.f32 %v700, %v864
    %v929 = vadd.f32 %v701, %v865
    %v930 = vadd.f32 %v702, %v866
    %v931 = vadd.f32 %v703, %v867
    %v932 = vadd.f32 %v704, %v868
    %v933 = vadd.f32 %v705, %v869
    %v934 = vadd.f32 %v706, %v870
    %v935 = vadd.f32 %v707, %v871
    %v936 = vmax.f32 %v872, 0.0
    %v937 = vmax.f32 %v873, 0.0
    %v938 = vmax.f32 %v874, 0.0
    %v939 = vmax.f32 %v875, 0.0
    %v940 = vmax.f32 %v876, 0.0
    %v941 = vmax.f32 %v877, 0.0
    %v942 = vmax.f32 %v878, 0.0
    %v943 = vmax.f32 %v879, 0.0
    %v944 = vmax.f32 %v880, 0.0
    %v945 = vmax.f32 %v881, 0.0
    %v946 = vmax.f32 %v882, 0.0
    %v947 = vmax.f32 %v883, 0.0
    %v948 = vmax.f32 %v884, 0.0
    %v949 = vmax.f32 %v885, 0.0
    %v950 = vmax.f32 %v886, 0.0
    %v951 = vmax.f32 %v887, 0.0
    %v952 = vmax.f32 %v888, 0.0
    %v953 = vmax.f32 %v889, 0.0
    %v954 = vmax.f32 %v890, 0.0
    %v955 = vmax.f32 %v891, 0.0
    %v956 = vmax.f32 %v892, 0.0
    %v957 = vmax.f32 %v893, 0.0
    %v958 = vmax.f32 %v894, 0.0
    %v959 = vmax.f32 %v895, 0.0
    %v960 = vmax.f32 %v896, 0.0
    %v961 = vmax.f32 %v897, 0.0
    %v962 = vmax.f32 %v898, 0.0
    %v963 = vmax.f32 %v899, 0.0
    %v964 = vmax.f32 %v900, 0.0
    %v965 = vmax.f32 %v901, 0.0
    %v966 = vmax.f32 %v902, 0.0
    %v967 = vmax.f32 %v903, 0.0
    %v968 = vmax.f32 %v904, 0.0
    %v969 = vmax.f32 %v905, 0.0
    %v970 = vmax.f32 %v906, 0.0
    %v971 = vmax.f32 %v907, 0.0
    %v972 = vmax.f32 %v908, 0.0
    %v973 = vmax.f32 %v909, 0.0
    %v974 = vmax.f32 %v910, 0.0
    %v975 = vmax.f32 %v911, 0.0
    %v976 = vmax.f32 %v912, 0.0
    %v977 = vmax.f32 %v913, 0.0
    %v978 = vmax.f32 %v914, 0.0
    %v979 = vmax.f32 %v915, 0.0
    %v980 = vmax.f32 %v916, 0.0
    %v981 = vmax.f32 %v917, 0.0
    %v982 = vmax.f32 %v918, 0.0
    %v983 = vmax.f32 %v919, 0.0
    %v984 = vmax.f32 %v920, 0.0
    %v985 = vmax.f32 %v921, 0.0
    %v986 = vmax.f32 %v922, 0.0
    %v987 = vmax.f32 %v923, 0.0
    %v988 = vmax.f32 %v924, 0.0
    %v989 = vmax.f32 %v925, 0.0
    %v990 = vmax.f32 %v926, 0.0
    %v991 = vmax.f32 %v927, 0.0
    %v992 = vmax.f32 %v928, 0.0
    %v993 = vmax.f32 %v929, 0.0
    %v994 = vmax.f32 %v930, 0.0
    %v995 = vmax.f32 %v931, 0.0
    %v996 = vmax.f32 %v932, 0.0
    %v997 = vmax.f32 %v933, 0.0
    %v998 = vmax.f32 %v934, 0.0
    %v999 = vmax.f32 %v935, 0.0
    %v1000 = vadd.f32 %v936, %v937
    %1001 = vadd.xlane.f32.xlu0 %v1000
    %v1002 = vpop.xlane.xlu0 %1001
    %v1003 = vadd.f32 %v938, %v939
    %1004 = vadd.xlane.f32.xlu0 %v1003
    %v1005 = vpop.xlane.xlu0 %1004
    %v1006 = vadd.f32 %v940, %v941
    %1007 = vadd.xlane.f32.xlu0 %v1006
    %v1008 = vpop.xlane.xlu0 %1007
    %v1009 = vadd.f32 %v942, %v943
    %1010 = vadd.xlane.f32.xlu0 %v1009
    %v1011 = vpop.xlane.xlu0 %1010
    %v1012 = vadd.f32 %v944, %v945
    %1013 = vadd.xlane.f32.xlu0 %v1012
    %v1014 = vpop.xlane.xlu0 %1013
    %v1015 = vadd.f32 %v946, %v947
    %1016 = vadd.xlane.f32.xlu0 %v1015
    %v1017 = vpop.xlane.xlu0 %1016
    %v1018 = vadd.f32 %v948, %v949
    %1019 = vadd.xlane.f32.xlu0 %v1018
    %v1020 = vpop.xlane.xlu0 %1019
    %v1021 = vadd.f32 %v950, %v951
    %1022 = vadd.xlane.f32.xlu0 %v1021
    %v1023 = vpop.xlane.xlu0 %1022
    %v1024 = vadd.f32 %v952, %v953
    %1025 = vadd.xlane.f32.xlu0 %v1024
    %v1026 = vpop.xlane.xlu0 %1025
    %v1027 = vadd.f32 %v954, %v955
    %1028 = vadd.xlane.f32.xlu0 %v1027
    %v1029 = vpop.xlane.xlu0 %1028
    %v1030 = vadd.f32 %v956, %v957
    %1031 = vadd.xlane.f32.xlu0 %v1030
    %v1032 = vpop.xlane.xlu0 %1031
    %v1033 = vadd.f32 %v958, %v959
    %1034 = vadd.xlane.f32.xlu0 %v1033
    %v1035 = vpop.xlane.xlu0 %1034
    %v1036 = vadd.f32 %v960, %v961
    %1037 = vadd.xlane.f32.xlu0 %v1036
    %v1038 = vpop.xlane.xlu0 %1037
    %v1039 = vadd.f32 %v962, %v963
    %1040 = vadd.xlane.f32.xlu0 %v1039
    %v1041 = vpop.xlane.xlu0 %1040
    %v1042 = vadd.f32 %v964, %v965
    %1043 = vadd.xlane.f32.xlu0 %v1042
    %v1044 = vpop.xlane.xlu0 %1043
    %v1045 = vadd.f32 %v966, %v967
    %1046 = vadd.xlane.f32.xlu0 %v1045
    %v1047 = vpop.xlane.xlu0 %1046
    %v1048 = vadd.f32 %v968, %v969
    %1049 = vadd.xlane.f32.xlu0 %v1048
    %v1050 = vpop.xlane.xlu0 %1049
    %v1051 = vadd.f32 %v970, %v971
    %1052 = vadd.xlane.f32.xlu0 %v1051
    %v1053 = vpop.xlane.xlu0 %1052
    %v1054 = vadd.f32 %v972, %v973
    %1055 = vadd.xlane.f32.xlu0 %v1054
    %v1056 = vpop.xlane.xlu0 %1055
    %v1057 = vadd.f32 %v974, %v975
    %1058 = vadd.xlane.f32.xlu0 %v1057
    %v1059 = vpop.xlane.xlu0 %1058
    %v1060 = vadd.f32 %v976, %v977
    %1061 = vadd.xlane.f32.xlu0 %v1060
    %v1062 = vpop.xlane.xlu0 %1061
    %v1063 = vadd.f32 %v978, %v979
    %1064 = vadd.xlane.f32.xlu0 %v1063
    %v1065 = vpop.xlane.xlu0 %1064
    %v1066 = vadd.f32 %v980, %v981
    %1067 = vadd.xlane.f32.xlu0 %v1066
    %v1068 = vpop.xlane.xlu0 %1067
    %v1069 = vadd.f32 %v982, %v983
    %1070 = vadd.xlane.f32.xlu0 %v1069
    %v1071 = vpop.xlane.xlu0 %1070
    %v1072 = vadd.f32 %v984, %v985
    %1073 = vadd.xlane.f32.xlu0 %v1072
    %v1074 = vpop.xlane.xlu0 %1073
    %v1075 = vadd.f32 %v986, %v987
    %1076 = vadd.xlane.f32.xlu0 %v1075
    %v1077 = vpop.xlane.xlu0 %1076
    %v1078 = vadd.f32 %v988, %v989
    %1079 = vadd.xlane.f32.xlu0 %v1078
    %v1080 = vpop.xlane.xlu0 %1079
    %v1081 = vadd.f32 %v990, %v991
    %1082 = vadd.xlane.f32.xlu0 %v1081
    %v1083 = vpop.xlane.xlu0 %1082
    %v1084 = vadd.f32 %v992, %v993
    %1085 = vadd.xlane.f32.xlu0 %v1084
    %v1086 = vpop.xlane.xlu0 %1085
    %v1087 = vadd.f32 %v994, %v995
    %1088 = vadd.xlane.f32.xlu0 %v1087
    %v1089 = vpop.xlane.xlu0 %1088
    %v1090 = vadd.f32 %v996, %v997
    %1091 = vadd.xlane.f32.xlu0 %v1090
    %v1092 = vpop.xlane.xlu0 %1091
    %v1093 = vadd.f32 %v998, %v999
    %1094 = vadd.xlane.f32.xlu0 %v1093
    %v1095 = vpop.xlane.xlu0 %1094
    %v1096 = vmul.f32 %v1002, 0.00390625
    %v1097 = vmul.f32 %v1005, 0.00390625
    %v1098 = vmul.f32 %v1008, 0.00390625
    %v1099 = vmul.f32 %v1011, 0.00390625
    %v1100 = vmul.f32 %v1014, 0.00390625
    %v1101 = vmul.f32 %v1017, 0.00390625
    %v1102 = vmul.f32 %v1020, 0.00390625
    %v1103 = vmul.f32 %v1023, 0.00390625
    %v1104 = vmul.f32 %v1026, 0.00390625
    %v1105 = vmul.f32 %v1029, 0.00390625
    %v1106 = vmul.f32 %v1032, 0.00390625
    %v1107 = vmul.f32 %v1035, 0.00390625
    %v1108 = vmul.f32 %v1038, 0.00390625
    %v1109 = vmul.f32 %v1041, 0.00390625
    %v1110 = vmul.f32 %v1044, 0.00390625
    %v1111 = vmul.f32 %v1047, 0.00390625
    %v1112 = vmul.f32 %v1050, 0.00390625
    %v1113 = vmul.f32 %v1053, 0.00390625
    %v1114 = vmul.f32 %v1056, 0.00390625
    %v1115 = vmul.f32 %v1059, 0.00390625
    %v1116 = vmul.f32 %v1062, 0.00390625
    %v1117 = vmul.f32 %v1065, 0.00390625
    %v1118 = vmul.f32 %v1068, 0.00390625
    %v1119 = vmul.f32 %v1071, 0.00390625
    %v1120 = vmul.f32 %v1074, 0.00390625
    %v1121 = vmul.f32 %v1077, 0.00390625
    %v1122 = vmul.f32 %v1080, 0.00390625
    %v1123 = vmul.f32 %v1083, 0.00390625
    %v1124 = vmul.f32 %v1086, 0.00390625
    %v1125 = vmul.f32 %v1089, 0.00390625
    %v1126 = vmul.f32 %v1092, 0.00390625
    %v1127 = vmul.f32 %v1095, 0.00390625
    %v1128 = vld [vmem:[%s2] sm:$0xff]
    %v1129 = vld [vmem:[%s2 + $0x8] sm:$0xff]
    %v1130 = vld [vmem:[%s2 + $0x10] sm:$0xff]
    %v1131 = vld [vmem:[%s2 + $0x18] sm:$0xff]
    %v1132 = vld [vmem:[%s2 + $0x20] sm:$0xff]
    %v1133 = vld [vmem:[%s2 + $0x28] sm:$0xff]
    %v1134 = vld [vmem:[%s2 + $0x30] sm:$0xff]
    %v1135 = vld [vmem:[%s2 + $0x38] sm:$0xff]
    %v1136 = vld [vmem:[%s2 + $0x40] sm:$0xff]
    %v1137 = vld [vmem:[%s2 + $0x48] sm:$0xff]
    %v1138 = vld [vmem:[%s2 + $0x50] sm:$0xff]
    %v1139 = vld [vmem:[%s2 + $0x58] sm:$0xff]
    %v1140 = vld [vmem:[%s2 + $0x60] sm:$0xff]
    %v1141 = vld [vmem:[%s2 + $0x68] sm:$0xff]
    %v1142 = vld [vmem:[%s2 + $0x70] sm:$0xff]
    %v1143 = vld [vmem:[%s2 + $0x78] sm:$0xff]
    %v1144 = vld [vmem:[%s3] sm:$0x1]
    %v1146 = vlaneseq
    %v1147 = vshrl.u32 %v1146, 7
    %v1148 = vsub.s32 0, %v1147
    %v1149 = vrot.slane %v1144, %v1148
    %v1183 = vlaneseq
    %v1184 = vand.u32 %v1183, 127
    %v1185 = vlaneseq
    %v1186 = vshrl.u32 %v1185, 7
    %v1187 = vsub.s32 %v1184, %v1186
    %v1188 = vrot.slane %v1096, %v1187
    %v1189 = vadd.s32 %v1184, 4294967288
    %v1190 = vlaneseq
    %v1191 = vshrl.u32 %v1190, 7
    %v1192 = vsub.s32 %v1189, %v1191
    %v1193 = vrot.slane %v1097, %v1192
    %vm1194 = vcmask 130112
    %v1195 = vsel %vm1194, %v1193, %v1188
    %v1196 = vadd.s32 %v1184, 4294967280
    %v1197 = vlaneseq
    %v1198 = vshrl.u32 %v1197, 7
    %v1199 = vsub.s32 %v1196, %v1198
    %v1200 = vrot.slane %v1098, %v1199
    %vm1201 = vcmask 195712
    %v1202 = vsel %vm1201, %v1200, %v1195
    %v1203 = vadd.s32 %v1184, 4294967272
    %v1204 = vlaneseq
    %v1205 = vshrl.u32 %v1204, 7
    %v1206 = vsub.s32 %v1203, %v1205
    %v1207 = vrot.slane %v1099, %v1206
    %vm1208 = vcmask 261312
    %v1209 = vsel %vm1208, %v1207, %v1202
    %v1210 = vadd.s32 %v1184, 4294967264
    %v1211 = vlaneseq
    %v1212 = vshrl.u32 %v1211, 7
    %v1213 = vsub.s32 %v1210, %v1212
    %v1214 = vrot.slane %v1100, %v1213
    %vm1215 = vcmask 326912
    %v1216 = vsel %vm1215, %v1214, %v1209
    %v1217 = vadd.s32 %v1184, 4294967256
    %v1218 = vlaneseq
    %v1219 = vshrl.u32 %v1218, 7
    %v1220 = vsub.s32 %v1217, %v1219
    %v1221 = vrot.slane %v1101, %v1220
    %vm1222 = vcmask 392512
    %v1223 = vsel %vm1222, %v1221, %v1216
    %v1224 = vadd.s32 %v1184, 4294967248
    %v1225 = vlaneseq
    %v1226 = vshrl.u32 %v1225, 7
    %v1227 = vsub.s32 %v1224, %v1226
    %v1228 = vrot.slane %v1102, %v1227
    %vm1229 = vcmask 458112
    %v1230 = vsel %vm1229, %v1228, %v1223
    %v1231 = vadd.s32 %v1184, 4294967240
    %v1232 = vlaneseq
    %v1233 = vshrl.u32 %v1232, 7
    %v1234 = vsub.s32 %v1231, %v1233
    %v1235 = vrot.slane %v1103, %v1234
    %vm1236 = vcmask 523712
    %v1237 = vsel %vm1236, %v1235, %v1230
    %v1238 = vadd.s32 %v1184, 4294967232
    %v1239 = vlaneseq
    %v1240 = vshrl.u32 %v1239, 7
    %v1241 = vsub.s32 %v1238, %v1240
    %v1242 = vrot.slane %v1104, %v1241
    %vm1243 = vcmask 589312
    %v1244 = vsel %vm1243, %v1242, %v1237
    %v1245 = vadd.s32 %v1184, 4294967224
    %v1246 = vlaneseq
    %v1247 = vshrl.u32 %v1246, 7
    %v1248 = vsub.s32 %v1245, %v1247
    %v1249 = vrot.slane %v1105, %v1248
    %vm1250 = vcmask 654912
    %v1251 = vsel %vm1250, %v1249, %v1244
    %v1252 = vadd.s32 %v1184, 4294967216
    %v1253 = vlaneseq
    %v1254 = vshrl.u32 %v1253, 7
    %v1255 = vsub.s32 %v1252, %v1254
    %v1256 = vrot.slane %v1106, %v1255
    %vm1257 = vcmask 720512
    %v1258 = vsel %vm1257, %v1256, %v1251
    %v1259 = vadd.s32 %v1184, 4294967208
    %v1260 = vlaneseq
    %v1261 = vshrl.u32 %v1260, 7
    %v1262 = vsub.s32 %v1259, %v1261
    %v1263 = vrot.slane %v1107, %v1262
    %vm1264 = vcmask 786112
    %v1265 = vsel %vm1264, %v1263, %v1258
    %v1266 = vadd.s32 %v1184, 4294967200
    %v1267 = vlaneseq
    %v1268 = vshrl.u32 %v1267, 7
    %v1269 = vsub.s32 %v1266, %v1268
    %v1270 = vrot.slane %v1108, %v1269
    %vm1271 = vcmask 851712
    %v1272 = vsel %vm1271, %v1270, %v1265
    %v1273 = vadd.s32 %v1184, 4294967192
    %v1274 = vlaneseq
    %v1275 = vshrl.u32 %v1274, 7
    %v1276 = vsub.s32 %v1273, %v1275
    %v1277 = vrot.slane %v1109, %v1276
    %vm1278 = vcmask 917312
    %v1279 = vsel %vm1278, %v1277, %v1272
    %v1280 = vadd.s32 %v1184, 4294967184
    %v1281 = vlaneseq
    %v1282 = vshrl.u32 %v1281, 7
    %v1283 = vsub.s32 %v1280, %v1282
    %v1284 = vrot.slane %v1110, %v1283
    %vm1285 = vcmask 982912
    %v1286 = vsel %vm1285, %v1284, %v1279
    %v1287 = vadd.s32 %v1184, 4294967176
    %v1288 = vlaneseq
    %v1289 = vshrl.u32 %v1288, 7
    %v1290 = vsub.s32 %v1287, %v1289
    %v1291 = vrot.slane %v1111, %v1290
    %vm1292 = vcmask 1048512
    %v1293 = vsel %vm1292, %v1291, %v1286
    %v1294 = vlaneseq
    %v1295 = vshrl.u32 %v1294, 7
    %v1296 = vsub.s32 %v1184, %v1295
    %v1297 = vrot.slane %v1112, %v1296
    %v1298 = vlaneseq
    %v1299 = vshrl.u32 %v1298, 7
    %v1300 = vsub.s32 %v1189, %v1299
    %v1301 = vrot.slane %v1113, %v1300
    %v1302 = vsel %vm1194, %v1301, %v1297
    %v1303 = vlaneseq
    %v1304 = vshrl.u32 %v1303, 7
    %v1305 = vsub.s32 %v1196, %v1304
    %v1306 = vrot.slane %v1114, %v1305
    %v1307 = vsel %vm1201, %v1306, %v1302
    %v1308 = vlaneseq
    %v1309 = vshrl.u32 %v1308, 7
    %v1310 = vsub.s32 %v1203, %v1309
    %v1311 = vrot.slane %v1115, %v1310
    %v1312 = vsel %vm1208, %v1311, %v1307
    %v1313 = vlaneseq
    %v1314 = vshrl.u32 %v1313, 7
    %v1315 = vsub.s32 %v1210, %v1314
    %v1316 = vrot.slane %v1116, %v1315
    %v1317 = vsel %vm1215, %v1316, %v1312
    %v1318 = vlaneseq
    %v1319 = vshrl.u32 %v1318, 7
    %v1320 = vsub.s32 %v1217, %v1319
    %v1321 = vrot.slane %v1117, %v1320
    %v1322 = vsel %vm1222, %v1321, %v1317
    %v1323 = vlaneseq
    %v1324 = vshrl.u32 %v1323, 7
    %v1325 = vsub.s32 %v1224, %v1324
    %v1326 = vrot.slane %v1118, %v1325
    %v1327 = vsel %vm1229, %v1326, %v1322
    %v1328 = vlaneseq
    %v1329 = vshrl.u32 %v1328, 7
    %v1330 = vsub.s32 %v1231, %v1329
    %v1331 = vrot.slane %v1119, %v1330
    %v1332 = vsel %vm1236, %v1331, %v1327
    %v1333 = vlaneseq
    %v1334 = vshrl.u32 %v1333, 7
    %v1335 = vsub.s32 %v1238, %v1334
    %v1336 = vrot.slane %v1120, %v1335
    %v1337 = vsel %vm1243, %v1336, %v1332
    %v1338 = vlaneseq
    %v1339 = vshrl.u32 %v1338, 7
    %v1340 = vsub.s32 %v1245, %v1339
    %v1341 = vrot.slane %v1121, %v1340
    %v1342 = vsel %vm1250, %v1341, %v1337
    %v1343 = vlaneseq
    %v1344 = vshrl.u32 %v1343, 7
    %v1345 = vsub.s32 %v1252, %v1344
    %v1346 = vrot.slane %v1122, %v1345
    %v1347 = vsel %vm1257, %v1346, %v1342
    %v1348 = vlaneseq
    %v1349 = vshrl.u32 %v1348, 7
    %v1350 = vsub.s32 %v1259, %v1349
    %v1351 = vrot.slane %v1123, %v1350
    %v1352 = vsel %vm1264, %v1351, %v1347
    %v1353 = vlaneseq
    %v1354 = vshrl.u32 %v1353, 7
    %v1355 = vsub.s32 %v1266, %v1354
    %v1356 = vrot.slane %v1124, %v1355
    %v1357 = vsel %vm1271, %v1356, %v1352
    %v1358 = vlaneseq
    %v1359 = vshrl.u32 %v1358, 7
    %v1360 = vsub.s32 %v1273, %v1359
    %v1361 = vrot.slane %v1125, %v1360
    %v1362 = vsel %vm1278, %v1361, %v1357
    %v1363 = vlaneseq
    %v1364 = vshrl.u32 %v1363, 7
    %v1365 = vsub.s32 %v1280, %v1364
    %v1366 = vrot.slane %v1126, %v1365
    %v1367 = vsel %vm1285, %v1366, %v1362
    %v1368 = vlaneseq
    %v1369 = vshrl.u32 %v1368, 7
    %v1370 = vsub.s32 %v1287, %v1369
    %v1371 = vrot.slane %v1127, %v1370
    %v1372 = vsel %vm1292, %v1371, %v1367
    %vm1373 = vcmask 1041409
    %v1374 = vsel %vm1373, %v1372, %v1293
    %1376 = vmatprep.subr.mxu0 0.0
    %1377 = vmatpush1.msra.mxu0 %v1128
    %1378 = vmatprep.subr.mxu0 0.0
    %1379 = vmatpush1.msra.mxu0 %v1129
    %1380 = vmatprep.subr.mxu0 0.0
    %1381 = vmatpush1.msra.mxu0 %v1130
    %1382 = vmatprep.subr.mxu0 0.0
    %1383 = vmatpush1.msra.mxu0 %v1131
    %1384 = vmatprep.subr.mxu0 0.0
    %1385 = vmatpush1.msra.mxu0 %v1132
    %1386 = vmatprep.subr.mxu0 0.0
    %1387 = vmatpush1.msra.mxu0 %v1133
    %1388 = vmatprep.subr.mxu0 0.0
    %1389 = vmatpush1.msra.mxu0 %v1134
    %1390 = vmatprep.subr.mxu0 0.0
    %1391 = vmatpush1.msra.mxu0 %v1135
    %1392 = vmatprep.subr.mxu0 0.0
    %1393 = vmatpush1.msra.mxu0 %v1136
    %1394 = vmatprep.subr.mxu0 0.0
    %1395 = vmatpush1.msra.mxu0 %v1137
    %1396 = vmatprep.subr.mxu0 0.0
    %1397 = vmatpush1.msra.mxu0 %v1138
    %1398 = vmatprep.subr.mxu0 0.0
    %1399 = vmatpush1.msra.mxu0 %v1139
    %1400 = vmatprep.subr.mxu0 0.0
    %1401 = vmatpush1.msra.mxu0 %v1140
    %1402 = vmatprep.subr.mxu0 0.0
    %1403 = vmatpush1.msra.mxu0 %v1141
    %1404 = vmatprep.subr.mxu0 0.0
    %1405 = vmatpush1.msra.mxu0 %v1142
    %1406 = vmatprep.subr.mxu0 0.0
    %1407 = vmatpush1.msra.mxu0 %v1143
    %1408 = vmatprep.subr.mxu0 0.0
    %1409 = vmatpush1.msra.mxu0 0.0
    %1410 = vmatprep.subr.mxu0 0.0
    %1411 = vmatpush1.msra.mxu0 0.0
    %1412 = vmatprep.subr.mxu0 0.0
    %1413 = vmatpush1.msra.mxu0 0.0
    %1414 = vmatprep.subr.mxu0 0.0
    %1415 = vmatpush1.msra.mxu0 0.0
    %1416 = vmatprep.subr.mxu0 0.0
    %1417 = vmatpush1.msra.mxu0 0.0
    %1418 = vmatprep.subr.mxu0 0.0
    %1419 = vmatpush1.msra.mxu0 0.0
    %1420 = vmatprep.subr.mxu0 0.0
    %1421 = vmatpush1.msra.mxu0 0.0
    %1422 = vmatprep.subr.mxu0 0.0
    %1423 = vmatpush1.msra.mxu0 0.0
    %1424 = vmatprep.subr.mxu0 0.0
    %1425 = vmatpush1.msra.mxu0 0.0
    %1426 = vmatprep.subr.mxu0 0.0
    %1427 = vmatpush1.msra.mxu0 0.0
    %1428 = vmatprep.subr.mxu0 0.0
    %1429 = vmatpush1.msra.mxu0 0.0
    %1430 = vmatprep.subr.mxu0 0.0
    %1431 = vmatpush1.msra.mxu0 0.0
    %1432 = vmatprep.subr.mxu0 0.0
    %1433 = vmatpush1.msra.mxu0 0.0
    %1434 = vmatprep.subr.mxu0 0.0
    %1435 = vmatpush1.msra.mxu0 0.0
    %1436 = vmatprep.subr.mxu0 0.0
    %1437 = vmatpush1.msra.mxu0 0.0
    %1438 = vmatprep.subr.mxu0 0.0
    %1439 = vmatpush1.msra.mxu0 0.0
    %1440 = vmatprep.mubr.f32.mxu0 0.0
    %1441 = vmatmul.mubr.f32.gmra.mrb[0].mxu0 %v1374
    %v1442 = vpop.f32.mrb[0].mxu0
    %v1443 = vadd.f32 %v1149, %v1442
    %v1444 = vpop.f32.mrb[0].mxu0
    %1445 = vdwg.mxu0
    %v1446 = vmax.f32 %v1443, 0.0
    %v1447 = vld [vmem:[#allocation5] sm:$0xff]
    %v1448 = vld [vmem:[#allocation5 + $0x8] sm:$0xff]
    %v1449 = vld [vmem:[#allocation5 + $0x10] sm:$0xff]
    %v1450 = vld [vmem:[#allocation5 + $0x18] sm:$0xff]
    %v1451 = vld [vmem:[#allocation5 + $0x20] sm:$0xff]
    %v1452 = vld [vmem:[#allocation5 + $0x28] sm:$0xff]
    %v1453 = vld [vmem:[#allocation5 + $0x30] sm:$0xff]
    %v1454 = vld [vmem:[#allocation5 + $0x38] sm:$0xff]
    %v1455 = vld [vmem:[#allocation5 + $0x40] sm:$0xff]
    %v1456 = vld [vmem:[#allocation5 + $0x48] sm:$0xff]
    %v1457 = vld [vmem:[#allocation5 + $0x50] sm:$0xff]
    %v1458 = vld [vmem:[#allocation5 + $0x58] sm:$0xff]
    %v1459 = vld [vmem:[#allocation5 + $0x60] sm:$0xff]
    %v1460 = vld [vmem:[#allocation5 + $0x68] sm:$0xff]
    %v1461 = vld [vmem:[#allocation5 + $0x70] sm:$0xff]
    %v1462 = vld [vmem:[#allocation5 + $0x78] sm:$0xff]
    %v1463 = vld [vmem:[%s5] sm:$0x1]
    %v1465 = vlaneseq
    %v1466 = vshrl.u32 %v1465, 7
    %v1467 = vsub.s32 0, %v1466
    %v1468 = vrot.slane %v1463, %v1467
    %1470 = vmatprep.subr.mxu0 0.0
    %1471 = vmatpush1.msra.mxu0 %v1447
    %1472 = vmatprep.subr.mxu0 0.0
    %1473 = vmatpush1.msra.mxu0 %v1448
    %1474 = vmatprep.subr.mxu0 0.0
    %1475 = vmatpush1.msra.mxu0 %v1449
    %1476 = vmatprep.subr.mxu0 0.0
    %1477 = vmatpush1.msra.mxu0 %v1450
    %1478 = vmatprep.subr.mxu0 0.0
    %1479 = vmatpush1.msra.mxu0 %v1451
    %1480 = vmatprep.subr.mxu0 0.0
    %1481 = vmatpush1.msra.mxu0 %v1452
    %1482 = vmatprep.subr.mxu0 0.0
    %1483 = vmatpush1.msra.mxu0 %v1453
    %1484 = vmatprep.subr.mxu0 0.0
    %1485 = vmatpush1.msra.mxu0 %v1454
    %1486 = vmatprep.subr.mxu0 0.0
    %1487 = vmatpush1.msra.mxu0 %v1455
    %1488 = vmatprep.subr.mxu0 0.0
    %1489 = vmatpush1.msra.mxu0 %v1456
    %1490 = vmatprep.subr.mxu0 0.0
    %1491 = vmatpush1.msra.mxu0 %v1457
    %1492 = vmatprep.subr.mxu0 0.0
    %1493 = vmatpush1.msra.mxu0 %v1458
    %1494 = vmatprep.subr.mxu0 0.0
    %1495 = vmatpush1.msra.mxu0 %v1459
    %1496 = vmatprep.subr.mxu0 0.0
    %1497 = vmatpush1.msra.mxu0 %v1460
    %1498 = vmatprep.subr.mxu0 0.0
    %1499 = vmatpush1.msra.mxu0 %v1461
    %1500 = vmatprep.subr.mxu0 0.0
    %1501 = vmatpush1.msra.mxu0 %v1462
    %1502 = vmatprep.subr.mxu0 0.0
    %1503 = vmatpush1.msra.mxu0 0.0
    %1504 = vmatprep.subr.mxu0 0.0
    %1505 = vmatpush1.msra.mxu0 0.0
    %1506 = vmatprep.subr.mxu0 0.0
    %1507 = vmatpush1.msra.mxu0 0.0
    %1508 = vmatprep.subr.mxu0 0.0
    %1509 = vmatpush1.msra.mxu0 0.0
    %1510 = vmatprep.subr.mxu0 0.0
    %1511 = vmatpush1.msra.mxu0 0.0
    %1512 = vmatprep.subr.mxu0 0.0
    %1513 = vmatpush1.msra.mxu0 0.0
    %1514 = vmatprep.subr.mxu0 0.0
    %1515 = vmatpush1.msra.mxu0 0.0
    %1516 = vmatprep.subr.mxu0 0.0
    %1517 = vmatpush1.msra.mxu0 0.0
    %1518 = vmatprep.subr.mxu0 0.0
    %1519 = vmatpush1.msra.mxu0 0.0
    %1520 = vmatprep.subr.mxu0 0.0
    %1521 = vmatpush1.msra.mxu0 0.0
    %1522 = vmatprep.subr.mxu0 0.0
    %1523 = vmatpush1.msra.mxu0 0.0
    %1524 = vmatprep.subr.mxu0 0.0
    %1525 = vmatpush1.msra.mxu0 0.0
    %1526 = vmatprep.subr.mxu0 0.0
    %1527 = vmatpush1.msra.mxu0 0.0
    %1528 = vmatprep.subr.mxu0 0.0
    %1529 = vmatpush1.msra.mxu0 0.0
    %1530 = vmatprep.subr.mxu0 0.0
    %1531 = vmatpush1.msra.mxu0 0.0
    %1532 = vmatprep.subr.mxu0 0.0
    %1533 = vmatpush1.msra.mxu0 0.0
    %1534 = vmatprep.mubr.f32.mxu0 0.0
    %1535 = vmatmul.mubr.f32.gmra.mrb[0].mxu0 %v1446
    %v1536 = vpop.f32.mrb[0].mxu0
    %v1537 = vadd.f32 %v1468, %v1536
    %v1538 = vpop.f32.mrb[0].mxu0
    %1539 = vdwg.mxu0
    %1540 = vst [vmem:[#allocation7] sm:$0x3] %v1537
    // Predicated region
    $region34: #{tpu_custom_call.1} parent=1 // pred_check
      _
    $region35: #{tpu_custom_call.1} parent=1 // pred_check_branch
      %1542 = sbr.rel (0) target = $region37
    $region36: #{tpu_custom_call.1} parent=1 // pred_region
      %s1544 = ssub.s32 32, 32
      %1545 = vsyncadd [#allocation4], %s1544
      %s1547 = sshll.u32 [#allocation7], 4
      %s1548 = int_to_ptr.vmem [resolvable:$true] %s1547
      %1550 = dma.vmem_to_hbm [thread:$0]  %s1548, 32, %s6, [#allocation4]
    $region37: #{tpu_custom_call.1} parent=1 // pred_fallthru
      _
    // Predicated region
    $region38: #{tpu_custom_call.1} parent=1 // pred_check
      _
    $region39: #{tpu_custom_call.1} parent=1 // pred_check_branch
      %1552 = sbr.rel (0) target = $region41
    $region40: #{tpu_custom_call.1} parent=1 // pred_region
      %1553 = dma.done [#allocation4], 32
    $region41: #{tpu_custom_call.1} parent=1 // pred_fallthru
      _
    %1554 = vsyncpa [#allocation3], 1
    %1555 = vsyncpa [#allocation6], 1
    %1556 = vsyncpa [#allocation4], 1

</llo_original>
